<compile_context>
chip_gen: v6e
topology: v6e:2x2x1
jax: 0.10.0
libtpu: 0.0.40
codegen_flags: <defaults>
</compile_context>

<pallas_src>
import functools

import jax
import jax.numpy as jnp
from jax.experimental import pallas as pl
from jax.experimental.pallas import tpu as pltpu

EPS = 1e-5


def fold_bn(gamma, beta, mean, var):
    """Inference BatchNorm folded into per-channel scale/bias."""
    scale = gamma / jnp.sqrt(var + EPS)
    bias = beta - mean * scale
    return scale, bias


def band_weights(w_hwio, width):
    """Fold kw taps + width zero-padding of a 3x3 conv into banded matrices.

    Returns (KH, W*Cin, W*Cout) with
      M[kh][w_in*Cin+ci, w_out*Cout+co] = w[kh, w_in-w_out+1, ci, co]
    (zero outside the band / outside the image).
    """
    KH, KW, Cin, Cout = w_hwio.shape
    wi = jnp.arange(width)[:, None, None]
    kw = jnp.arange(KW)[None, :, None]
    wo = jnp.arange(width)[None, None, :]
    sel = (wi == wo + kw - (KW // 2)).astype(w_hwio.dtype)        # (W, KW, W)
    m = jnp.einsum("ikj,hkab->hiajb", sel, w_hwio)                # (KH, W, Cin, W, Cout)
    return m.reshape(KH, width * Cin, width * Cout)


def basic_block_kernel(H, x_ref, m1_ref, m2_ref, b1_ref, b2_ref, out_ref):
    # x_ref   : (NB*H, W*C)   lane-dense activation rows (NB batch images stacked)
    # m*_ref  : (3, W*C, W*C) banded conv weights, BN scale pre-folded
    # b*_ref  : (1, W*C)      folded BatchNorm bias (tiled over W)
    # out_ref : (NB*H, W*C)
    NBH, WC = out_ref.shape
    x = x_ref[...]

    # Per-image top/bottom row masks (row index modulo H handles both the
    # image border and the batch-stacking boundary). Computed once, reused.
    rmod = jax.lax.broadcasted_iota(jnp.int32, (NBH, WC), 0) % H
    top = rmod == 0
    bot = rmod == H - 1

    def conv3x3(y, m_ref):
        # Height halo via XLU roll + row mask; width halo is inside m_ref.
        zy = jnp.zeros_like(y)
        up = jnp.where(top, zy, pltpu.roll(y, 1, 0))          # y[h-1], 0 at top
        dn = jnp.where(bot, zy, pltpu.roll(y, NBH - 1, 0))    # y[h+1], 0 at bottom
        acc = jnp.dot(up, m_ref[0], preferred_element_type=jnp.float32)
        acc += jnp.dot(y, m_ref[1], preferred_element_type=jnp.float32)
        acc += jnp.dot(dn, m_ref[2], preferred_element_type=jnp.float32)
        return acc                                            # (NBH, WC) f32

    # conv1 (scale folded) -> +bias1 -> relu
    y1 = jnp.maximum(conv3x3(x, m1_ref) + b1_ref[...], 0.0)
    # conv2 (scale folded) -> +bias2
    y2 = conv3x3(y1.astype(x.dtype), m2_ref) + b2_ref[...]
    # residual add -> relu (identity residual: stride=1, Cin==Cout)
    out_ref[...] = jnp.maximum(y2 + x.astype(jnp.float32), 0.0).astype(out_ref.dtype)


def _pick_batch_tile(N, H, WC, itemsize, budget_bytes=4 << 20):
    """Largest divisor NB of N whose (NB*H, WC) block fits the VMEM budget and
    keeps the sublane dim a multiple of 8 (or spans the whole array)."""
    for nb in range(N, 0, -1):
        if N % nb:
            continue
        shape_ok = (nb == N) or ((nb * H) % 8 == 0)
        if shape_ok and nb * H * WC * itemsize <= budget_bytes:
            return nb
    return 1


def basic_block_pallas(x_nchw, params, compute_dtype=jnp.float32):
    """BasicBlock forward. x_nchw: (N, C, H, W) f32 -> (N, C, H, W) f32.

    compute_dtype=jnp.bfloat16 halves DMA/VMEM traffic on v6e/v7x (f32 MXU
    accumulation is kept either way); default f32 for tight verification.
    """
    w1, w2, bn1, bn2 = params["w1"], params["w2"], params["bn1"], params["bn2"]
    N, C, H, W = x_nchw.shape
    KH, KW, Cin, Cout = w1.shape
    assert (Cin, Cout) == (C, C) and (KH, KW) == (3, 3), (
        "identity-residual BasicBlock only (stride=1, no downsample)")
    WC = W * C

    # Lane-dense activation layout: (N*H, W*C); flattened lane index = w*C + c.
    x2d = jnp.transpose(x_nchw, (0, 2, 3, 1)).reshape(N * H, WC).astype(compute_dtype)

    s1, b1c = fold_bn(*bn1)
    s2, b2c = fold_bn(*bn2)
    # Fold BN scale into the conv weights (per output channel) before banding;
    # only the bias remains as an in-kernel add.
    m1 = band_weights(w1 * s1[None, None, None, :], W).astype(compute_dtype)
    m2 = band_weights(w2 * s2[None, None, None, :], W).astype(compute_dtype)
    b1 = jnp.tile(b1c, W)[None, :].astype(jnp.float32)
    b2 = jnp.tile(b2c, W)[None, :].astype(jnp.float32)

    itemsize = jnp.dtype(compute_dtype).itemsize
    NB = _pick_batch_tile(N, H, WC, itemsize)
    NBH = NB * H

    grid_spec = pltpu.PrefetchScalarGridSpec(
        num_scalar_prefetch=0,
        grid=(N // NB,),
        in_specs=[
            pl.BlockSpec((NBH, WC), lambda i: (i, 0)),
            pl.BlockSpec((3, WC, WC), lambda i: (0, 0, 0)),
            pl.BlockSpec((3, WC, WC), lambda i: (0, 0, 0)),
            pl.BlockSpec((1, WC), lambda i: (0, 0)),
            pl.BlockSpec((1, WC), lambda i: (0, 0)),
        ],
        out_specs=pl.BlockSpec((NBH, WC), lambda i: (i, 0)),
    )

    cost = pl.CostEstimate(
        flops=2 * 3 * 2 * N * H * WC * WC,            # 2 convs x 3 row-matmuls each
        transcendentals=0,
        bytes_accessed=(N * H * WC * (itemsize + 4)   # activations in + f32 out
                        + 2 * 3 * WC * WC * itemsize  # banded weights
                        + 2 * WC * 4),                # folded BN biases
    )

    out2d = pl.pallas_call(
        functools.partial(basic_block_kernel, H),
        out_shape=jax.ShapeDtypeStruct((N * H, WC), jnp.float32),
        grid_spec=grid_spec,
        compiler_params=pltpu.CompilerParams(
            dimension_semantics=("parallel",),        # batch tiles split across TCs (v7x)
            vmem_limit_bytes=64 * 1024 * 1024,
        ),
        cost_estimate=cost,
    )(x2d, m1, m2, b1, b2)

    out_nhwc = out2d.reshape(N, H, W, C)
    return jnp.transpose(out_nhwc, (0, 3, 1, 2))                  # back to NCHW


def basic_block_reference(x_nchw, params):
    """Pure-JAX reference (same math, lax conv) for verification."""
    w1, w2, bn1, bn2 = params["w1"], params["w2"], params["bn1"], params["bn2"]
    x = jnp.transpose(x_nchw, (0, 2, 3, 1))

    def conv(x, w):
        return jax.lax.conv_general_dilated(
            x, w, window_strides=(1, 1), padding=((1, 1), (1, 1)),
            dimension_numbers=("NHWC", "HWIO", "NHWC"))

    s1, b1 = fold_bn(*bn1)
    s2, b2 = fold_bn(*bn2)
    out = jnp.maximum(conv(x, w1) * s1 + b1, 0.0)
    out = conv(out, w2) * s2 + b2
    out = jnp.maximum(out + x, 0.0)
    return jnp.transpose(out, (0, 3, 1, 2))


def make_params(key, inplanes, planes):
    k = jax.random.split(key, 8)
    # HWIO conv weights (bias=False per conv3x3).
    w1 = jax.random.normal(k[0], (3, 3, inplanes, planes), jnp.float32) * 0.1
    w2 = jax.random.normal(k[1], (3, 3, planes, planes), jnp.float32) * 0.1
    bn1 = (jax.random.normal(k[2], (planes,), jnp.float32) * 0.1 + 1.0,   # gamma
           jax.random.normal(k[3], (planes,), jnp.float32) * 0.1,         # beta
           jax.random.normal(k[4], (planes,), jnp.float32) * 0.1,         # running_mean
           jnp.abs(jax.random.normal(k[5], (planes,), jnp.float32)) * 0.1 + 1.0)  # running_var
    bn2 = (jax.random.normal(k[6], (planes,), jnp.float32) * 0.1 + 1.0,
           jax.random.normal(k[7], (planes,), jnp.float32) * 0.1,
           jnp.zeros((planes,), jnp.float32),
           jnp.ones((planes,), jnp.float32))
    return {"w1": w1, "w2": w2, "bn1": bn1, "bn2": bn2}


if __name__ == "__main__":
    N, C, H, W = 2, 8, 16, 16          # inplanes == planes (identity residual); W*C = 128
    key = jax.random.PRNGKey(0)
    kx, kp = jax.random.split(key)
    x = jax.random.normal(kx, (N, C, H, W), jnp.float32)
    params = make_params(kp, C, C)

    out = jax.block_until_ready(basic_block_pallas(x, params))
    ref = jax.block_until_ready(basic_block_reference(x, params))

    assert out.shape == (N, C, H, W)
    err = jnp.max(jnp.abs(out - ref))
    assert jnp.allclose(out, ref, atol=1e-3, rtol=1e-3), f"max abs err {err}"

    print("KERNEL_OK")
</pallas_src>

<mosaic_0001>
module attributes {stable_mosaic.version = 11 : i64} {
  func.func @basic_block_kernel(%arg0: i32, %arg1: memref<32x128xf32, #tpu.memory_space<vmem>>, %arg2: memref<3x128x128xf32, #tpu.memory_space<vmem>>, %arg3: memref<3x128x128xf32, #tpu.memory_space<vmem>>, %arg4: memref<1x128xf32, #tpu.memory_space<vmem>>, %arg5: memref<1x128xf32, #tpu.memory_space<vmem>>, %arg6: memref<32x128xf32, #tpu.memory_space<vmem>>) attributes {dimension_semantics = [#tpu.dimension_semantics<parallel>], iteration_bounds = array<i64: 1>, scalar_prefetch = 0 : i64, scratch_operands = 0 : i64, tpu.core_type = #tpu.core_type<tc>, window_params = [{transform_indices = @transform_0, window_bounds = array<i64: 32, 128>}, {pipeline_mode = #tpu.pipeline_mode<synchronous>, transform_indices = @transform_1, window_bounds = array<i64: 3, 128, 128>}, {pipeline_mode = #tpu.pipeline_mode<synchronous>, transform_indices = @transform_2, window_bounds = array<i64: 3, 128, 128>}, {pipeline_mode = #tpu.pipeline_mode<synchronous>, transform_indices = @transform_3, window_bounds = array<i64: 1, 128>}, {pipeline_mode = #tpu.pipeline_mode<synchronous>, transform_indices = @transform_4, window_bounds = array<i64: 1, 128>}, {transform_indices = @transform_5, window_bounds = array<i64: 32, 128>}]} {
    %c0 = arith.constant 0 : index
    %c0_0 = arith.constant 0 : index
    %0 = vector.load %arg1[%c0, %c0_0] : memref<32x128xf32, #tpu.memory_space<vmem>>, vector<32x128xf32>
    %1 = tpu.iota {dimensions = array<i32: 0>} : vector<32x128xi32>
    %c16_i32 = arith.constant 16 : i32
    %c0_i32 = arith.constant 0 : i32
    %2 = arith.cmpi eq, %c16_i32, %c0_i32 : i32
    %c1_i32 = arith.constant 1 : i32
    %3 = arith.select %2, %c1_i32, %c16_i32 : i32
    %4 = vector.broadcast %3 : i32 to vector<32x128xi32>
    %5 = arith.remsi %1, %4 : vector<32x128xi32>
    %c0_i32_1 = arith.constant 0 : i32
    %6 = vector.broadcast %c0_i32_1 : i32 to vector<32x128xi32>
    %7 = arith.cmpi ne, %5, %6 : vector<32x128xi32>
    %c0_i32_2 = arith.constant 0 : i32
    %8 = vector.broadcast %c0_i32_2 : i32 to vector<32x128xi32>
    %9 = arith.cmpi slt, %5, %8 : vector<32x128xi32>
    %c0_i32_3 = arith.constant 0 : i32
    %10 = arith.cmpi slt, %3, %c0_i32_3 : i32
    %11 = vector.broadcast %10 : i1 to vector<32x128xi1>
    %12 = vector.broadcast %11 : vector<32x128xi1> to vector<32x128xi1>
    %13 = arith.xori %9, %12 : vector<32x128xi1>
    %14 = arith.andi %13, %7 : vector<32x128xi1>
    %15 = vector.broadcast %3 : i32 to vector<32x128xi32>
    %16 = arith.addi %5, %15 : vector<32x128xi32>
    %17 = arith.select %14, %16, %5 : vector<32x128xi1>, vector<32x128xi32>
    %c0_i32_4 = arith.constant 0 : i32
    %18 = vector.broadcast %c0_i32_4 : i32 to vector<32x128xi32>
    %19 = arith.cmpi eq, %17, %18 : vector<32x128xi32>
    %c15_i32 = arith.constant 15 : i32
    %20 = vector.broadcast %c15_i32 : i32 to vector<32x128xi32>
    %21 = arith.cmpi eq, %17, %20 : vector<32x128xi32>
    %cst = arith.constant 0.000000e+00 : f32
    %22 = vector.broadcast %cst : f32 to vector<32x128xf32>
    %c1_i32_5 = arith.constant 1 : i32
    %23 = tpu.dynamic_rotate %0 by %c1_i32_5 dim 0 : vector<32x128xf32>, i32 -> vector<32x128xf32>
    %24 = arith.select %19, %22, %23 : vector<32x128xi1>, vector<32x128xf32>
    %c31_i32 = arith.constant 31 : i32
    %25 = tpu.dynamic_rotate %0 by %c31_i32 dim 0 : vector<32x128xf32>, i32 -> vector<32x128xf32>
    %26 = arith.select %21, %22, %25 : vector<32x128xi1>, vector<32x128xf32>
    %c0_6 = arith.constant 0 : index
    %c0_7 = arith.constant 0 : index
    %c0_8 = arith.constant 0 : index
    %27 = vector.load %arg2[%c0_6, %c0_7, %c0_8] : memref<3x128x128xf32, #tpu.memory_space<vmem>>, vector<1x128x128xf32>
    %28 = vector.shape_cast %27 : vector<1x128x128xf32> to vector<128x128xf32>
    %cst_9 = arith.constant dense<0.000000e+00> : vector<32x128xf32>
    %29 = tpu.matmul %24, %28, %cst_9 {dimension_numbers = #tpu.dot_dimension_numbers<[1], [0], [0], [1], [0, 0, 1, 1], [], []>} : vector<32x128xf32>, vector<128x128xf32>, vector<32x128xf32> -> vector<32x128xf32>
    %c1 = arith.constant 1 : index
    %c0_10 = arith.constant 0 : index
    %c0_11 = arith.constant 0 : index
    %30 = vector.load %arg2[%c1, %c0_10, %c0_11] : memref<3x128x128xf32, #tpu.memory_space<vmem>>, vector<1x128x128xf32>
    %31 = vector.shape_cast %30 : vector<1x128x128xf32> to vector<128x128xf32>
    %cst_12 = arith.constant dense<0.000000e+00> : vector<32x128xf32>
    %32 = tpu.matmul %0, %31, %cst_12 {dimension_numbers = #tpu.dot_dimension_numbers<[1], [0], [0], [1], [0, 0, 1, 1], [], []>} : vector<32x128xf32>, vector<128x128xf32>, vector<32x128xf32> -> vector<32x128xf32>
    %33 = arith.addf %29, %32 : vector<32x128xf32>
    %c2 = arith.constant 2 : index
    %c0_13 = arith.constant 0 : index
    %c0_14 = arith.constant 0 : index
    %34 = vector.load %arg2[%c2, %c0_13, %c0_14] : memref<3x128x128xf32, #tpu.memory_space<vmem>>, vector<1x128x128xf32>
    %35 = vector.shape_cast %34 : vector<1x128x128xf32> to vector<128x128xf32>
    %cst_15 = arith.constant dense<0.000000e+00> : vector<32x128xf32>
    %36 = tpu.matmul %26, %35, %cst_15 {dimension_numbers = #tpu.dot_dimension_numbers<[1], [0], [0], [1], [0, 0, 1, 1], [], []>} : vector<32x128xf32>, vector<128x128xf32>, vector<32x128xf32> -> vector<32x128xf32>
    %37 = arith.addf %33, %36 : vector<32x128xf32>
    %c0_16 = arith.constant 0 : index
    %c0_17 = arith.constant 0 : index
    %38 = vector.load %arg4[%c0_16, %c0_17] : memref<1x128xf32, #tpu.memory_space<vmem>>, vector<1x128xf32>
    %39 = vector.broadcast %38 : vector<1x128xf32> to vector<32x128xf32>
    %40 = arith.addf %37, %39 : vector<32x128xf32>
    %cst_18 = arith.constant 0.000000e+00 : f32
    %41 = vector.broadcast %cst_18 : f32 to vector<32x128xf32>
    %42 = arith.maximumf %40, %41 : vector<32x128xf32>
    %cst_19 = arith.constant 0.000000e+00 : f32
    %43 = vector.broadcast %cst_19 : f32 to vector<32x128xf32>
    %c1_i32_20 = arith.constant 1 : i32
    %44 = tpu.dynamic_rotate %42 by %c1_i32_20 dim 0 : vector<32x128xf32>, i32 -> vector<32x128xf32>
    %45 = arith.select %19, %43, %44 : vector<32x128xi1>, vector<32x128xf32>
    %c31_i32_21 = arith.constant 31 : i32
    %46 = tpu.dynamic_rotate %42 by %c31_i32_21 dim 0 : vector<32x128xf32>, i32 -> vector<32x128xf32>
    %47 = arith.select %21, %43, %46 : vector<32x128xi1>, vector<32x128xf32>
    %c0_22 = arith.constant 0 : index
    %c0_23 = arith.constant 0 : index
    %c0_24 = arith.constant 0 : index
    %48 = vector.load %arg3[%c0_22, %c0_23, %c0_24] : memref<3x128x128xf32, #tpu.memory_space<vmem>>, vector<1x128x128xf32>
    %49 = vector.shape_cast %48 : vector<1x128x128xf32> to vector<128x128xf32>
    %cst_25 = arith.constant dense<0.000000e+00> : vector<32x128xf32>
    %50 = tpu.matmul %45, %49, %cst_25 {dimension_numbers = #tpu.dot_dimension_numbers<[1], [0], [0], [1], [0, 0, 1, 1], [], []>} : vector<32x128xf32>, vector<128x128xf32>, vector<32x128xf32> -> vector<32x128xf32>
    %c1_26 = arith.constant 1 : index
    %c0_27 = arith.constant 0 : index
    %c0_28 = arith.constant 0 : index
    %51 = vector.load %arg3[%c1_26, %c0_27, %c0_28] : memref<3x128x128xf32, #tpu.memory_space<vmem>>, vector<1x128x128xf32>
    %52 = vector.shape_cast %51 : vector<1x128x128xf32> to vector<128x128xf32>
    %cst_29 = arith.constant dense<0.000000e+00> : vector<32x128xf32>
    %53 = tpu.matmul %42, %52, %cst_29 {dimension_numbers = #tpu.dot_dimension_numbers<[1], [0], [0], [1], [0, 0, 1, 1], [], []>} : vector<32x128xf32>, vector<128x128xf32>, vector<32x128xf32> -> vector<32x128xf32>
    %54 = arith.addf %50, %53 : vector<32x128xf32>
    %c2_30 = arith.constant 2 : index
    %c0_31 = arith.constant 0 : index
    %c0_32 = arith.constant 0 : index
    %55 = vector.load %arg3[%c2_30, %c0_31, %c0_32] : memref<3x128x128xf32, #tpu.memory_space<vmem>>, vector<1x128x128xf32>
    %56 = vector.shape_cast %55 : vector<1x128x128xf32> to vector<128x128xf32>
    %cst_33 = arith.constant dense<0.000000e+00> : vector<32x128xf32>
    %57 = tpu.matmul %47, %56, %cst_33 {dimension_numbers = #tpu.dot_dimension_numbers<[1], [0], [0], [1], [0, 0, 1, 1], [], []>} : vector<32x128xf32>, vector<128x128xf32>, vector<32x128xf32> -> vector<32x128xf32>
    %58 = arith.addf %54, %57 : vector<32x128xf32>
    %c0_34 = arith.constant 0 : index
    %c0_35 = arith.constant 0 : index
    %59 = vector.load %arg5[%c0_34, %c0_35] : memref<1x128xf32, #tpu.memory_space<vmem>>, vector<1x128xf32>
    %60 = vector.broadcast %59 : vector<1x128xf32> to vector<32x128xf32>
    %61 = arith.addf %58, %60 : vector<32x128xf32>
    %62 = arith.addf %61, %0 : vector<32x128xf32>
    %cst_36 = arith.constant 0.000000e+00 : f32
    %63 = vector.broadcast %cst_36 : f32 to vector<32x128xf32>
    %64 = arith.maximumf %62, %63 : vector<32x128xf32>
    %c0_37 = arith.constant 0 : index
    %c0_38 = arith.constant 0 : index
    %65 = vector.load %arg6[%c0_37, %c0_38] : memref<32x128xf32, #tpu.memory_space<vmem>>, vector<32x128xf32>
    tpu.vector_store %arg6[%c0_37, %c0_38], %64 {strides = array<i32>} : memref<32x128xf32, #tpu.memory_space<vmem>>, vector<32x128xf32>,
    return
  }
  func.func @transform_0(%arg0: i32) -> (i32, i32) {
    %c0_i32 = arith.constant 0 : i32
    %c0_i32_0 = arith.constant 0 : i32
    return %arg0, %c0_i32 : i32, i32
  }
  func.func @transform_1(%arg0: i32) -> (i32, i32, i32) {
    %c0_i32 = arith.constant 0 : i32
    %c0_i32_0 = arith.constant 0 : i32
    %c0_i32_1 = arith.constant 0 : i32
    %c0_i32_2 = arith.constant 0 : i32
    return %c0_i32, %c0_i32_0, %c0_i32_1 : i32, i32, i32
  }
  func.func @transform_2(%arg0: i32) -> (i32, i32, i32) {
    %c0_i32 = arith.constant 0 : i32
    %c0_i32_0 = arith.constant 0 : i32
    %c0_i32_1 = arith.constant 0 : i32
    %c0_i32_2 = arith.constant 0 : i32
    return %c0_i32, %c0_i32_0, %c0_i32_1 : i32, i32, i32
  }
  func.func @transform_3(%arg0: i32) -> (i32, i32) {
    %c0_i32 = arith.constant 0 : i32
    %c0_i32_0 = arith.constant 0 : i32
    %c0_i32_1 = arith.constant 0 : i32
    return %c0_i32, %c0_i32_0 : i32, i32
  }
  func.func @transform_4(%arg0: i32) -> (i32, i32) {
    %c0_i32 = arith.constant 0 : i32
    %c0_i32_0 = arith.constant 0 : i32
    %c0_i32_1 = arith.constant 0 : i32
    return %c0_i32, %c0_i32_0 : i32, i32
  }
  func.func @transform_5(%arg0: i32) -> (i32, i32) {
    %c0_i32 = arith.constant 0 : i32
    %c0_i32_0 = arith.constant 0 : i32
    return %arg0, %c0_i32 : i32, i32
  }
}

</mosaic_0001>

<llo_original>
// kernel: tpu_custom_call.1
$region0: #{tpu_custom_call.1}
  #allocation0 [shape = 'u32[]', space=smem, size = 0x4, offset = 0x4, fixed_abs, tag = 'smem constant byte address 0x4 - core index']
  #allocation1 [shape = 'u32[144,128]{1,0:T(1,128)}', space=vmem, size = 0x12000, scoped, tag = 'internal scratch']
  %s0 = inlined_call_operand.hbm [shape: f32[32,128], index: 0, kind: input, shape index: {}]
  %s1 = inlined_call_operand.hbm [shape: f32[3,128,128], index: 1, kind: input, shape index: {}]
  %s2 = inlined_call_operand.hbm [shape: f32[3,128,128], index: 2, kind: input, shape index: {}]
  %s3 = inlined_call_operand.vmem [shape: f32[1,128], index: 3, kind: input, shape index: {}]
  %s4 = inlined_call_operand.vmem [shape: f32[1,128], index: 4, kind: input, shape index: {}]
  %s5 = inlined_call_operand.hbm [shape: f32[32,128], index: 5, kind: output, shape index: {}]
  %s6 = sld [smem:[#allocation0]]
  $region42: #{tpu_custom_call.1} parent=0
    _
  %s8 = ssub.s32 1, %s6
  %s9 = scalar_select 0, %s8, %s6
  $region1: #{tpu_custom_call.1} parent=0
    #allocation2 [shape = 'u8[16384]{0}', space=vmem, size = 0x4000, scoped, tag = 'input window, operand 0, single buffered']
    #allocation3 [shape = 's32[1]{0}', space=sflag, size = 0x4, scoped, tag = 'scoped memory for tpu_custom_call.1']
    #allocation4 [shape = 's32[1]{0}', space=sflag, size = 0x4, scoped, tag = 'scoped memory for tpu_custom_call.1']
    #allocation5 [shape = 'u8[196608]{0}', space=vmem, size = 0x30000, scoped, tag = 'input window, operand 1, single buffered']
    #allocation6 [shape = 's32[1]{0}', space=sflag, size = 0x4, scoped, tag = 'scoped memory for tpu_custom_call.1']
    #allocation7 [shape = 'u8[196608]{0}', space=vmem, size = 0x30000, scoped, tag = 'input window, operand 2, single buffered']
    #allocation8 [shape = 'u8[16384]{0}', space=vmem, size = 0x4000, scoped, tag = 'output window, operand 0, single buffered']
    %10 = vsyncpa [#allocation3], 0
    %11 = vsyncpa [#allocation6], 0
    %12 = vsyncpa [#allocation4], 0
    // Predicated region
    $region2: #{tpu_custom_call.1} parent=1 // pred_check
      _
    $region3: #{tpu_custom_call.1} parent=1 // pred_check_branch
      %14 = sbr.rel (0) target = $region5
    $region4: #{tpu_custom_call.1} parent=1 // pred_region
      %s16 = ssub.s32 512, 512
      %17 = vsyncadd [#allocation3], %s16
      %s18 = sshll.u32 [#allocation2], 4
      %s19 = int_to_ptr.vmem [resolvable:$true] %s18
      %24 = dma.hbm_to_vmem [thread:$0]  %s0, 512, %s19, [#allocation3], 128, 128, 8
    $region5: #{tpu_custom_call.1} parent=1 // pred_fallthru
      _
    // Predicated region
    $region6: #{tpu_custom_call.1} parent=1 // pred_check
      _
    $region7: #{tpu_custom_call.1} parent=1 // pred_check_branch
      %26 = sbr.rel (0) target = $region9
    $region8: #{tpu_custom_call.1} parent=1 // pred_region
      %s28 = ssub.s32 6144, 6144
      %29 = vsyncadd [#allocation6], %s28
      %s30 = sshll.u32 [#allocation5], 4
      %s31 = int_to_ptr.vmem [resolvable:$true] %s30
      %36 = dma.hbm_to_vmem [thread:$0]  %s1, 6144, %s31, [#allocation6], 128, 128, 8
    $region9: #{tpu_custom_call.1} parent=1 // pred_fallthru
      _
    // Predicated region
    $region10: #{tpu_custom_call.1} parent=1 // pred_check
      _
    $region11: #{tpu_custom_call.1} parent=1 // pred_check_branch
      %38 = sbr.rel (0) target = $region13
    $region12: #{tpu_custom_call.1} parent=1 // pred_region
      %s40 = ssub.s32 6144, 6144
      %41 = vsyncadd [#allocation6], %s40
      %s42 = sshll.u32 [#allocation7], 4
      %s43 = int_to_ptr.vmem [resolvable:$true] %s42
      %48 = dma.hbm_to_vmem [thread:$0]  %s2, 6144, %s43, [#allocation6], 128, 128, 8
    $region13: #{tpu_custom_call.1} parent=1 // pred_fallthru
      _
    // Predicated region
    $region14: #{tpu_custom_call.1} parent=1 // pred_check
      _
    $region15: #{tpu_custom_call.1} parent=1 // pred_check_branch
      %50 = sbr.rel (0) target = $region17
    $region16: #{tpu_custom_call.1} parent=1 // pred_region
      _
    $region17: #{tpu_custom_call.1} parent=1 // pred_fallthru
      _
    // Predicated region
    $region18: #{tpu_custom_call.1} parent=1 // pred_check
      _
    $region19: #{tpu_custom_call.1} parent=1 // pred_check_branch
      %52 = sbr.rel (0) target = $region21
    $region20: #{tpu_custom_call.1} parent=1 // pred_region
      _
    $region21: #{tpu_custom_call.1} parent=1 // pred_fallthru
      _
    // Predicated region
    $region22: #{tpu_custom_call.1} parent=1 // pred_check
      _
    $region23: #{tpu_custom_call.1} parent=1 // pred_check_branch
      %54 = sbr.rel (0) target = $region25
    $region24: #{tpu_custom_call.1} parent=1 // pred_region
      %55 = dma.done [#allocation3], 512
    $region25: #{tpu_custom_call.1} parent=1 // pred_fallthru
      _
    // Predicated region
    $region26: #{tpu_custom_call.1} parent=1 // pred_check
      _
    $region27: #{tpu_custom_call.1} parent=1 // pred_check_branch
      %57 = sbr.rel (0) target = $region29
    $region28: #{tpu_custom_call.1} parent=1 // pred_region
      %58 = dma.done [#allocation6], 6144
    $region29: #{tpu_custom_call.1} parent=1 // pred_fallthru
      _
    // Predicated region
    $region30: #{tpu_custom_call.1} parent=1 // pred_check
      _
    $region31: #{tpu_custom_call.1} parent=1 // pred_check_branch
      %60 = sbr.rel (0) target = $region33
    $region32: #{tpu_custom_call.1} parent=1 // pred_region
      %61 = dma.done [#allocation6], 6144
    $region33: #{tpu_custom_call.1} parent=1 // pred_fallthru
      _
    %v62 = vld [vmem:[#allocation2] sm:$0xff]
    %v63 = vld [vmem:[#allocation2 + $0x8] sm:$0xff]
    %v64 = vld [vmem:[#allocation2 + $0x10] sm:$0xff]
    %v65 = vld [vmem:[#allocation2 + $0x18] sm:$0xff]
    %v66 = vlaneseq
    %v67 = vshrl.u32 %v66, 7
    %v68 = vadd.s32 %v67, 8
    %v69 = vadd.s32 %v67, 16
    %v70 = vadd.s32 %v67, 24
    %vm71 = vcmp.lt.s32.totalorder %v67, 0
    %v72 = vsub.s32 0, %v67
    %v73 = vsel %vm71, %v72, %v67
    %v74 = vshrl.u32 %v73, 4
    %v75 = vand.u32 %v73, 15
    %v76 = vsub.s32 0, %v75
    %v77 = vsel %vm71, %v76, %v75
    %vm78 = vcmp.lt.s32.totalorder %v68, 0
    %v79 = vsub.s32 0, %v68
    %v80 = vsel %vm78, %v79, %v68
    %v81 = vshrl.u32 %v80, 4
    %v82 = vand.u32 %v80, 15
    %v83 = vsub.s32 0, %v82
    %v84 = vsel %vm78, %v83, %v82
    %vm85 = vcmp.lt.s32.totalorder %v69, 0
    %v86 = vsub.s32 0, %v69
    %v87 = vsel %vm85, %v86, %v69
    %v88 = vshrl.u32 %v87, 4
    %v89 = vand.u32 %v87, 15
    %v90 = vsub.s32 0, %v89
    %v91 = vsel %vm85, %v90, %v89
    %vm92 = vcmp.lt.s32.totalorder %v70, 0
    %v93 = vsub.s32 0, %v70
    %v94 = vsel %vm92, %v93, %v70
    %v95 = vshrl.u32 %v94, 4
    %v96 = vand.u32 %v94, 15
    %v97 = vsub.s32 0, %v96
    %v98 = vsel %vm92, %v97, %v96
    %vm99 = vcmp.ne.s32.totalorder %v77, 0
    %vm100 = vcmp.ne.s32.totalorder %v84, 0
    %vm101 = vcmp.ne.s32.totalorder %v91, 0
    %vm102 = vcmp.ne.s32.totalorder %v98, 0
    %vm103 = vcmp.lt.s32.totalorder %v77, 0
    %vm104 = vcmp.lt.s32.totalorder %v84, 0
    %vm105 = vcmp.lt.s32.totalorder %v91, 0
    %vm106 = vcmp.lt.s32.totalorder %v98, 0
    %vm107 = vmand %vm103, %vm99
    %vm108 = vmand %vm104, %vm100
    %vm109 = vmand %vm105, %vm101
    %vm110 = vmand %vm106, %vm102
    %v111 = vadd.s32 %v77, 16
    %v112 = vadd.s32 %v84, 16
    %v113 = vadd.s32 %v91, 16
    %v114 = vadd.s32 %v98, 16
    %v115 = vsel %vm107, %v111, %v77
    %v116 = vsel %vm108, %v112, %v84
    %v117 = vsel %vm109, %v113, %v91
    %v118 = vsel %vm110, %v114, %v98
    %vm119 = vcmp.eq.s32.totalorder %v115, 0
    %vm120 = vcmp.eq.s32.totalorder %v116, 0
    %vm121 = vcmp.eq.s32.totalorder %v117, 0
    %vm122 = vcmp.eq.s32.totalorder %v118, 0
    %vm123 = vcmp.eq.s32.totalorder %v115, 15
    %vm124 = vcmp.eq.s32.totalorder %v116, 15
    %vm125 = vcmp.eq.s32.totalorder %v117, 15
    %vm126 = vcmp.eq.s32.totalorder %v118, 15
    %v127 = vrot.slane %v62, 7
    %v128 = vrot.slane %v63, 7
    %v129 = vrot.slane %v64, 7
    %v130 = vrot.slane %v65, 7
    %vm131 = vcmp.lt.s32.totalorder %v67, 1
    %v132 = vsel %vm131, %v129, %v130
    %v133 = vsel %vm131, %v128, %v129
    %v134 = vsel %vm131, %v127, %v128
    %v135 = vsel %vm131, %v130, %v127
    %v136 = vsel %vm119, 0.0, %v135
    %v137 = vsel %vm120, 0.0, %v134
    %v138 = vsel %vm121, 0.0, %v133
    %v139 = vsel %vm122, 0.0, %v132
    %v140 = vrot.slane %v62, 1
    %v141 = vrot.slane %v63, 1
    %v142 = vrot.slane %v64, 1
    %v143 = vrot.slane %v65, 1
    %vm144 = vcmp.lt.s32.totalorder %v67, 7
    %v145 = vsel %vm144, %v142, %v143
    %v146 = vsel %vm144, %v141, %v142
    %v147 = vsel %vm144, %v140, %v141
    %v148 = vsel %vm144, %v143, %v140
    %v149 = vsel %vm123, 0.0, %v147
    %v150 = vsel %vm124, 0.0, %v146
    %v151 = vsel %vm125, 0.0, %v145
    %v152 = vsel %vm126, 0.0, %v148
    %v153 = vld [vmem:[#allocation5] sm:$0xff]
    %v154 = vld [vmem:[#allocation5 + $0x8] sm:$0xff]
    %v155 = vld [vmem:[#allocation5 + $0x10] sm:$0xff]
    %v156 = vld [vmem:[#allocation5 + $0x18] sm:$0xff]
    %v157 = vld [vmem:[#allocation5 + $0x20] sm:$0xff]
    %v158 = vld [vmem:[#allocation5 + $0x28] sm:$0xff]
    %v159 = vld [vmem:[#allocation5 + $0x30] sm:$0xff]
    %v160 = vld [vmem:[#allocation5 + $0x38] sm:$0xff]
    %v161 = vld [vmem:[#allocation5 + $0x40] sm:$0xff]
    %v162 = vld [vmem:[#allocation5 + $0x48] sm:$0xff]
    %v163 = vld [vmem:[#allocation5 + $0x50] sm:$0xff]
    %v164 = vld [vmem:[#allocation5 + $0x58] sm:$0xff]
    %v165 = vld [vmem:[#allocation5 + $0x60] sm:$0xff]
    %v166 = vld [vmem:[#allocation5 + $0x68] sm:$0xff]
    %v167 = vld [vmem:[#allocation5 + $0x70] sm:$0xff]
    %v168 = vld [vmem:[#allocation5 + $0x78] sm:$0xff]
    %s169 = scalar_lea.vmem [#allocation5], 128
    %v170 = vld [vmem:[%s169] sm:$0xff]
    %v171 = vld [vmem:[%s169 + $0x8] sm:$0xff]
    %v172 = vld [vmem:[%s169 + $0x10] sm:$0xff]
    %v173 = vld [vmem:[%s169 + $0x18] sm:$0xff]
    %v174 = vld [vmem:[%s169 + $0x20] sm:$0xff]
    %v175 = vld [vmem:[%s169 + $0x28] sm:$0xff]
    %v176 = vld [vmem:[%s169 + $0x30] sm:$0xff]
    %v177 = vld [vmem:[%s169 + $0x38] sm:$0xff]
    %v178 = vld [vmem:[%s169 + $0x40] sm:$0xff]
    %v179 = vld [vmem:[%s169 + $0x48] sm:$0xff]
    %v180 = vld [vmem:[%s169 + $0x50] sm:$0xff]
    %v181 = vld [vmem:[%s169 + $0x58] sm:$0xff]
    %v182 = vld [vmem:[%s169 + $0x60] sm:$0xff]
    %v183 = vld [vmem:[%s169 + $0x68] sm:$0xff]
    %v184 = vld [vmem:[%s169 + $0x70] sm:$0xff]
    %v185 = vld [vmem:[%s169 + $0x78] sm:$0xff]
    %186 = vmatprep.subr.mxu0 0.0
    %187 = vmatpush1.msra.mxu0 %v185
    %188 = vmatprep.subr.mxu0 0.0
    %189 = vmatpush1.msra.mxu0 %v184
    %190 = vmatprep.subr.mxu0 0.0
    %191 = vmatpush1.msra.mxu0 %v183
    %192 = vmatprep.subr.mxu0 0.0
    %193 = vmatpush1.msra.mxu0 %v182
    %194 = vmatprep.subr.mxu0 0.0
    %195 = vmatpush1.msra.mxu0 %v181
    %196 = vmatprep.subr.mxu0 0.0
    %197 = vmatpush1.msra.mxu0 %v180
    %198 = vmatprep.subr.mxu0 0.0
    %199 = vmatpush1.msra.mxu0 %v179
    %200 = vmatprep.subr.mxu0 0.0
    %201 = vmatpush1.msra.mxu0 %v178
    %202 = vmatprep.subr.mxu0 0.0
    %203 = vmatpush1.msra.mxu0 %v177
    %204 = vmatprep.subr.mxu0 0.0
    %205 = vmatpush1.msra.mxu0 %v176
    %206 = vmatprep.subr.mxu0 0.0
    %207 = vmatpush1.msra.mxu0 %v175
    %208 = vmatprep.subr.mxu0 0.0
    %209 = vmatpush1.msra.mxu0 %v174
    %210 = vmatprep.subr.mxu0 0.0
    %211 = vmatpush1.msra.mxu0 %v173
    %212 = vmatprep.subr.mxu0 0.0
    %213 = vmatpush1.msra.mxu0 %v172
    %214 = vmatprep.subr.mxu0 0.0
    %215 = vmatpush1.msra.mxu0 %v171
    %216 = vmatprep.subr.mxu0 0.0
    %217 = vmatpush1.msra.mxu0 %v170
    %218 = vmatprep.subr.mxu0 0.0
    %219 = vmatpush2.msra.mxu0 0.0
    %220 = vmatprep.subr.mxu0 0.0
    %221 = vmatpush2.msra.mxu0 0.0
    %222 = vmatprep.subr.mxu0 0.0
    %223 = vmatpush2.msra.mxu0 0.0
    %224 = vmatprep.subr.mxu0 0.0
    %225 = vmatpush2.msra.mxu0 0.0
    %226 = vmatprep.subr.mxu0 0.0
    %227 = vmatpush2.msra.mxu0 0.0
    %228 = vmatprep.subr.mxu0 0.0
    %229 = vmatpush2.msra.mxu0 0.0
    %230 = vmatprep.subr.mxu0 0.0
    %231 = vmatpush2.msra.mxu0 0.0
    %232 = vmatprep.subr.mxu0 0.0
    %233 = vmatpush2.msra.mxu0 0.0
    %234 = vmatprep.subr.mxu0 0.0
    %235 = vmatpush2.msra.mxu0 0.0
    %236 = vmatprep.subr.mxu0 0.0
    %237 = vmatpush2.msra.mxu0 0.0
    %238 = vmatprep.subr.mxu0 0.0
    %239 = vmatpush2.msra.mxu0 0.0
    %240 = vmatprep.subr.mxu0 0.0
    %241 = vmatpush2.msra.mxu0 0.0
    %242 = vmatprep.subr.mxu0 0.0
    %243 = vmatpush2.msra.mxu0 0.0
    %244 = vmatprep.subr.mxu0 0.0
    %245 = vmatpush2.msra.mxu0 0.0
    %246 = vmatprep.subr.mxu0 0.0
    %247 = vmatpush2.msra.mxu0 0.0
    %248 = vmatprep.subr.mxu0 0.0
    %249 = vmatpush2.msra.mxu0 0.0
    %250 = vmatprep.mubr.f32.mxu0 0.0
    %251 = vmatmul.mubr.f32.gmra.mxu0 %v62
    %v252 = vpop.f32.mrf.mxu0
    %v253 = vadd.f32 0.0, %v252
    %v254 = vpop.f32.mrf.mxu0
    %255 = vmatprep.mubr.f32.mxu0 0.0
    %256 = vmatmul.mubr.f32.gmra.mxu0 %v63
    %v257 = vpop.f32.mrf.mxu0
    %v258 = vadd.f32 0.0, %v257
    %v259 = vpop.f32.mrf.mxu0
    %260 = vmatprep.mubr.f32.mxu0 0.0
    %261 = vmatmul.mubr.f32.gmra.mxu0 %v64
    %v262 = vpop.f32.mrf.mxu0
    %v263 = vadd.f32 0.0, %v262
    %v264 = vpop.f32.mrf.mxu0
    %265 = vmatprep.mubr.f32.mxu0 0.0
    %266 = vmatmul.mubr.f32.gmra.mxu0 %v65
    %v267 = vpop.f32.mrf.mxu0
    %v268 = vadd.f32 0.0, %v267
    %v269 = vpop.f32.mrf.mxu0
    %270 = vdwg.mxu0
    %271 = vmatprep.subr.mxu0 0.0
    %272 = vmatpush1.msra.mxu0 %v168
    %273 = vmatprep.subr.mxu0 0.0
    %274 = vmatpush1.msra.mxu0 %v167
    %275 = vmatprep.subr.mxu0 0.0
    %276 = vmatpush1.msra.mxu0 %v166
    %277 = vmatprep.subr.mxu0 0.0
    %278 = vmatpush1.msra.mxu0 %v165
    %279 = vmatprep.subr.mxu0 0.0
    %280 = vmatpush1.msra.mxu0 %v164
    %281 = vmatprep.subr.mxu0 0.0
    %282 = vmatpush1.msra.mxu0 %v163
    %283 = vmatprep.subr.mxu0 0.0
    %284 = vmatpush1.msra.mxu0 %v162
    %285 = vmatprep.subr.mxu0 0.0
    %286 = vmatpush1.msra.mxu0 %v161
    %287 = vmatprep.subr.mxu0 0.0
    %288 = vmatpush1.msra.mxu0 %v160
    %289 = vmatprep.subr.mxu0 0.0
    %290 = vmatpush1.msra.mxu0 %v159
    %291 = vmatprep.subr.mxu0 0.0
    %292 = vmatpush1.msra.mxu0 %v158
    %293 = vmatprep.subr.mxu0 0.0
    %294 = vmatpush1.msra.mxu0 %v157
    %295 = vmatprep.subr.mxu0 0.0
    %296 = vmatpush1.msra.mxu0 %v156
    %297 = vmatprep.subr.mxu0 0.0
    %298 = vmatpush1.msra.mxu0 %v155
    %299 = vmatprep.subr.mxu0 0.0
    %300 = vmatpush1.msra.mxu0 %v154
    %301 = vmatprep.subr.mxu0 0.0
    %302 = vmatpush1.msra.mxu0 %v153
    %303 = vmatprep.subr.mxu0 0.0
    %304 = vmatpush2.msra.mxu0 0.0
    %305 = vmatprep.subr.mxu0 0.0
    %306 = vmatpush2.msra.mxu0 0.0
    %307 = vmatprep.subr.mxu0 0.0
    %308 = vmatpush2.msra.mxu0 0.0
    %309 = vmatprep.subr.mxu0 0.0
    %310 = vmatpush2.msra.mxu0 0.0
    %311 = vmatprep.subr.mxu0 0.0
    %312 = vmatpush2.msra.mxu0 0.0
    %313 = vmatprep.subr.mxu0 0.0
    %314 = vmatpush2.msra.mxu0 0.0
    %315 = vmatprep.subr.mxu0 0.0
    %316 = vmatpush2.msra.mxu0 0.0
    %317 = vmatprep.subr.mxu0 0.0
    %318 = vmatpush2.msra.mxu0 0.0
    %319 = vmatprep.subr.mxu0 0.0
    %320 = vmatpush2.msra.mxu0 0.0
    %321 = vmatprep.subr.mxu0 0.0
    %322 = vmatpush2.msra.mxu0 0.0
    %323 = vmatprep.subr.mxu0 0.0
    %324 = vmatpush2.msra.mxu0 0.0
    %325 = vmatprep.subr.mxu0 0.0
    %326 = vmatpush2.msra.mxu0 0.0
    %327 = vmatprep.subr.mxu0 0.0
    %328 = vmatpush2.msra.mxu0 0.0
    %329 = vmatprep.subr.mxu0 0.0
    %330 = vmatpush2.msra.mxu0 0.0
    %331 = vmatprep.subr.mxu0 0.0
    %332 = vmatpush2.msra.mxu0 0.0
    %333 = vmatprep.subr.mxu0 0.0
    %334 = vmatpush2.msra.mxu0 0.0
    %335 = vmatprep.mubr.f32.mxu0 0.0
    %336 = vmatmul.mubr.f32.gmra.mxu0 %v136
    %v337 = vpop.f32.mrf.mxu0
    %v338 = vadd.f32 %v253, %v337
    %v339 = vpop.f32.mrf.mxu0
    %340 = vmatprep.mubr.f32.mxu0 0.0
    %341 = vmatmul.mubr.f32.gmra.mxu0 %v137
    %v342 = vpop.f32.mrf.mxu0
    %v343 = vadd.f32 %v258, %v342
    %v344 = vpop.f32.mrf.mxu0
    %345 = vmatprep.mubr.f32.mxu0 0.0
    %346 = vmatmul.mubr.f32.gmra.mxu0 %v138
    %v347 = vpop.f32.mrf.mxu0
    %v348 = vadd.f32 %v263, %v347
    %v349 = vpop.f32.mrf.mxu0
    %350 = vmatprep.mubr.f32.mxu0 0.0
    %351 = vmatmul.mubr.f32.gmra.mxu0 %v139
    %v352 = vpop.f32.mrf.mxu0
    %v353 = vadd.f32 %v268, %v352
    %v354 = vpop.f32.mrf.mxu0
    %355 = vdwg.mxu0
    %s356 = scalar_lea.vmem [#allocation5], 256
    %v357 = vld [vmem:[%s356] sm:$0xff]
    %v358 = vld [vmem:[%s356 + $0x8] sm:$0xff]
    %v359 = vld [vmem:[%s356 + $0x10] sm:$0xff]
    %v360 = vld [vmem:[%s356 + $0x18] sm:$0xff]
    %v361 = vld [vmem:[%s356 + $0x20] sm:$0xff]
    %v362 = vld [vmem:[%s356 + $0x28] sm:$0xff]
    %v363 = vld [vmem:[%s356 + $0x30] sm:$0xff]
    %v364 = vld [vmem:[%s356 + $0x38] sm:$0xff]
    %v365 = vld [vmem:[%s356 + $0x40] sm:$0xff]
    %v366 = vld [vmem:[%s356 + $0x48] sm:$0xff]
    %v367 = vld [vmem:[%s356 + $0x50] sm:$0xff]
    %v368 = vld [vmem:[%s356 + $0x58] sm:$0xff]
    %v369 = vld [vmem:[%s356 + $0x60] sm:$0xff]
    %v370 = vld [vmem:[%s356 + $0x68] sm:$0xff]
    %v371 = vld [vmem:[%s356 + $0x70] sm:$0xff]
    %v372 = vld [vmem:[%s356 + $0x78] sm:$0xff]
    %373 = vmatprep.subr.mxu0 0.0
    %374 = vmatpush1.msra.mxu0 %v372
    %375 = vmatprep.subr.mxu0 0.0
    %376 = vmatpush1.msra.mxu0 %v371
    %377 = vmatprep.subr.mxu0 0.0
    %378 = vmatpush1.msra.mxu0 %v370
    %379 = vmatprep.subr.mxu0 0.0
    %380 = vmatpush1.msra.mxu0 %v369
    %381 = vmatprep.subr.mxu0 0.0
    %382 = vmatpush1.msra.mxu0 %v368
    %383 = vmatprep.subr.mxu0 0.0
    %384 = vmatpush1.msra.mxu0 %v367
    %385 = vmatprep.subr.mxu0 0.0
    %386 = vmatpush1.msra.mxu0 %v366
    %387 = vmatprep.subr.mxu0 0.0
    %388 = vmatpush1.msra.mxu0 %v365
    %389 = vmatprep.subr.mxu0 0.0
    %390 = vmatpush1.msra.mxu0 %v364
    %391 = vmatprep.subr.mxu0 0.0
    %392 = vmatpush1.msra.mxu0 %v363
    %393 = vmatprep.subr.mxu0 0.0
    %394 = vmatpush1.msra.mxu0 %v362
    %395 = vmatprep.subr.mxu0 0.0
    %396 = vmatpush1.msra.mxu0 %v361
    %397 = vmatprep.subr.mxu0 0.0
    %398 = vmatpush1.msra.mxu0 %v360
    %399 = vmatprep.subr.mxu0 0.0
    %400 = vmatpush1.msra.mxu0 %v359
    %401 = vmatprep.subr.mxu0 0.0
    %402 = vmatpush1.msra.mxu0 %v358
    %403 = vmatprep.subr.mxu0 0.0
    %404 = vmatpush1.msra.mxu0 %v357
    %405 = vmatprep.subr.mxu0 0.0
    %406 = vmatpush2.msra.mxu0 0.0
    %407 = vmatprep.subr.mxu0 0.0
    %408 = vmatpush2.msra.mxu0 0.0
    %409 = vmatprep.subr.mxu0 0.0
    %410 = vmatpush2.msra.mxu0 0.0
    %411 = vmatprep.subr.mxu0 0.0
    %412 = vmatpush2.msra.mxu0 0.0
    %413 = vmatprep.subr.mxu0 0.0
    %414 = vmatpush2.msra.mxu0 0.0
    %415 = vmatprep.subr.mxu0 0.0
    %416 = vmatpush2.msra.mxu0 0.0
    %417 = vmatprep.subr.mxu0 0.0
    %418 = vmatpush2.msra.mxu0 0.0
    %419 = vmatprep.subr.mxu0 0.0
    %420 = vmatpush2.msra.mxu0 0.0
    %421 = vmatprep.subr.mxu0 0.0
    %422 = vmatpush2.msra.mxu0 0.0
    %423 = vmatprep.subr.mxu0 0.0
    %424 = vmatpush2.msra.mxu0 0.0
    %425 = vmatprep.subr.mxu0 0.0
    %426 = vmatpush2.msra.mxu0 0.0
    %427 = vmatprep.subr.mxu0 0.0
    %428 = vmatpush2.msra.mxu0 0.0
    %429 = vmatprep.subr.mxu0 0.0
    %430 = vmatpush2.msra.mxu0 0.0
    %431 = vmatprep.subr.mxu0 0.0
    %432 = vmatpush2.msra.mxu0 0.0
    %433 = vmatprep.subr.mxu0 0.0
    %434 = vmatpush2.msra.mxu0 0.0
    %435 = vmatprep.subr.mxu0 0.0
    %436 = vmatpush2.msra.mxu0 0.0
    %437 = vmatprep.mubr.f32.mxu0 0.0
    %438 = vmatmul.mubr.f32.gmra.mxu0 %v149
    %v439 = vpop.f32.mrf.mxu0
    %v440 = vadd.f32 0.0, %v439
    %v441 = vpop.f32.mrf.mxu0
    %442 = vmatprep.mubr.f32.mxu0 0.0
    %443 = vmatmul.mubr.f32.gmra.mxu0 %v150
    %v444 = vpop.f32.mrf.mxu0
    %v445 = vadd.f32 0.0, %v444
    %v446 = vpop.f32.mrf.mxu0
    %447 = vmatprep.mubr.f32.mxu0 0.0
    %448 = vmatmul.mubr.f32.gmra.mxu0 %v151
    %v449 = vpop.f32.mrf.mxu0
    %v450 = vadd.f32 0.0, %v449
    %v451 = vpop.f32.mrf.mxu0
    %452 = vmatprep.mubr.f32.mxu0 0.0
    %453 = vmatmul.mubr.f32.gmra.mxu0 %v152
    %v454 = vpop.f32.mrf.mxu0
    %v455 = vadd.f32 0.0, %v454
    %v456 = vpop.f32.mrf.mxu0
    %457 = vdwg.mxu0
    %v458 = vadd.f32 %v338, %v440
    %v459 = vadd.f32 %v343, %v445
    %v460 = vadd.f32 %v348, %v450
    %v461 = vadd.f32 %v353, %v455
    %v462 = vld [vmem:[%s3] sm:$0x1]
    %v464 = vlaneseq
    %v465 = vshrl.u32 %v464, 7
    %v466 = vsub.s32 0, %v465
    %v467 = vrot.slane %v462, %v466
    %v469 = vadd.f32 %v458, %v467
    %v470 = vadd.f32 %v459, %v467
    %v471 = vadd.f32 %v460, %v467
    %v472 = vadd.f32 %v461, %v467
    %v473 = vmax.f32 %v469, 0.0
    %v474 = vmax.f32 %v470, 0.0
    %v475 = vmax.f32 %v471, 0.0
    %v476 = vmax.f32 %v472, 0.0
    %v477 = vrot.slane %v473, 7
    %v478 = vrot.slane %v474, 7
    %v479 = vrot.slane %v475, 7
    %v480 = vrot.slane %v476, 7
    %v481 = vsel %vm131, %v479, %v480
    %v482 = vsel %vm131, %v478, %v479
    %v483 = vsel %vm131, %v477, %v478
    %v484 = vsel %vm131, %v480, %v477
    %v485 = vsel %vm119, 0.0, %v484
    %v486 = vsel %vm120, 0.0, %v483
    %v487 = vsel %vm121, 0.0, %v482
    %v488 = vsel %vm122, 0.0, %v481
    %v489 = vrot.slane %v473, 1
    %v490 = vrot.slane %v474, 1
    %v491 = vrot.slane %v475, 1
    %v492 = vrot.slane %v476, 1
    %v493 = vsel %vm144, %v491, %v492
    %v494 = vsel %vm144, %v490, %v491
    %v495 = vsel %vm144, %v489, %v490
    %v496 = vsel %vm144, %v492, %v489
    %v497 = vsel %vm123, 0.0, %v495
    %v498 = vsel %vm124, 0.0, %v494
    %v499 = vsel %vm125, 0.0, %v493
    %v500 = vsel %vm126, 0.0, %v496
    %v501 = vld [vmem:[#allocation7] sm:$0xff]
    %v502 = vld [vmem:[#allocation7 + $0x8] sm:$0xff]
    %v503 = vld [vmem:[#allocation7 + $0x10] sm:$0xff]
    %v504 = vld [vmem:[#allocation7 + $0x18] sm:$0xff]
    %v505 = vld [vmem:[#allocation7 + $0x20] sm:$0xff]
    %v506 = vld [vmem:[#allocation7 + $0x28] sm:$0xff]
    %v507 = vld [vmem:[#allocation7 + $0x30] sm:$0xff]
    %v508 = vld [vmem:[#allocation7 + $0x38] sm:$0xff]
    %v509 = vld [vmem:[#allocation7 + $0x40] sm:$0xff]
    %v510 = vld [vmem:[#allocation7 + $0x48] sm:$0xff]
    %v511 = vld [vmem:[#allocation7 + $0x50] sm:$0xff]
    %v512 = vld [vmem:[#allocation7 + $0x58] sm:$0xff]
    %v513 = vld [vmem:[#allocation7 + $0x60] sm:$0xff]
    %v514 = vld [vmem:[#allocation7 + $0x68] sm:$0xff]
    %v515 = vld [vmem:[#allocation7 + $0x70] sm:$0xff]
    %v516 = vld [vmem:[#allocation7 + $0x78] sm:$0xff]
    %s517 = scalar_lea.vmem [#allocation7], 128
    %v518 = vld [vmem:[%s517] sm:$0xff]
    %v519 = vld [vmem:[%s517 + $0x8] sm:$0xff]
    %v520 = vld [vmem:[%s517 + $0x10] sm:$0xff]
    %v521 = vld [vmem:[%s517 + $0x18] sm:$0xff]
    %v522 = vld [vmem:[%s517 + $0x20] sm:$0xff]
    %v523 = vld [vmem:[%s517 + $0x28] sm:$0xff]
    %v524 = vld [vmem:[%s517 + $0x30] sm:$0xff]
    %v525 = vld [vmem:[%s517 + $0x38] sm:$0xff]
    %v526 = vld [vmem:[%s517 + $0x40] sm:$0xff]
    %v527 = vld [vmem:[%s517 + $0x48] sm:$0xff]
    %v528 = vld [vmem:[%s517 + $0x50] sm:$0xff]
    %v529 = vld [vmem:[%s517 + $0x58] sm:$0xff]
    %v530 = vld [vmem:[%s517 + $0x60] sm:$0xff]
    %v531 = vld [vmem:[%s517 + $0x68] sm:$0xff]
    %v532 = vld [vmem:[%s517 + $0x70] sm:$0xff]
    %v533 = vld [vmem:[%s517 + $0x78] sm:$0xff]
    %534 = vmatprep.subr.mxu0 0.0
    %535 = vmatpush1.msra.mxu0 %v533
    %536 = vmatprep.subr.mxu0 0.0
    %537 = vmatpush1.msra.mxu0 %v532
    %538 = vmatprep.subr.mxu0 0.0
    %539 = vmatpush1.msra.mxu0 %v531
    %540 = vmatprep.subr.mxu0 0.0
    %541 = vmatpush1.msra.mxu0 %v530
    %542 = vmatprep.subr.mxu0 0.0
    %543 = vmatpush1.msra.mxu0 %v529
    %544 = vmatprep.subr.mxu0 0.0
    %545 = vmatpush1.msra.mxu0 %v528
    %546 = vmatprep.subr.mxu0 0.0
    %547 = vmatpush1.msra.mxu0 %v527
    %548 = vmatprep.subr.mxu0 0.0
    %549 = vmatpush1.msra.mxu0 %v526
    %550 = vmatprep.subr.mxu0 0.0
    %551 = vmatpush1.msra.mxu0 %v525
    %552 = vmatprep.subr.mxu0 0.0
    %553 = vmatpush1.msra.mxu0 %v524
    %554 = vmatprep.subr.mxu0 0.0
    %555 = vmatpush1.msra.mxu0 %v523
    %556 = vmatprep.subr.mxu0 0.0
    %557 = vmatpush1.msra.mxu0 %v522
    %558 = vmatprep.subr.mxu0 0.0
    %559 = vmatpush1.msra.mxu0 %v521
    %560 = vmatprep.subr.mxu0 0.0
    %561 = vmatpush1.msra.mxu0 %v520
    %562 = vmatprep.subr.mxu0 0.0
    %563 = vmatpush1.msra.mxu0 %v519
    %564 = vmatprep.subr.mxu0 0.0
    %565 = vmatpush1.msra.mxu0 %v518
    %566 = vmatprep.subr.mxu0 0.0
    %567 = vmatpush2.msra.mxu0 0.0
    %568 = vmatprep.subr.mxu0 0.0
    %569 = vmatpush2.msra.mxu0 0.0
    %570 = vmatprep.subr.mxu0 0.0
    %571 = vmatpush2.msra.mxu0 0.0
    %572 = vmatprep.subr.mxu0 0.0
    %573 = vmatpush2.msra.mxu0 0.0
    %574 = vmatprep.subr.mxu0 0.0
    %575 = vmatpush2.msra.mxu0 0.0
    %576 = vmatprep.subr.mxu0 0.0
    %577 = vmatpush2.msra.mxu0 0.0
    %578 = vmatprep.subr.mxu0 0.0
    %579 = vmatpush2.msra.mxu0 0.0
    %580 = vmatprep.subr.mxu0 0.0
    %581 = vmatpush2.msra.mxu0 0.0
    %582 = vmatprep.subr.mxu0 0.0
    %583 = vmatpush2.msra.mxu0 0.0
    %584 = vmatprep.subr.mxu0 0.0
    %585 = vmatpush2.msra.mxu0 0.0
    %586 = vmatprep.subr.mxu0 0.0
    %587 = vmatpush2.msra.mxu0 0.0
    %588 = vmatprep.subr.mxu0 0.0
    %589 = vmatpush2.msra.mxu0 0.0
    %590 = vmatprep.subr.mxu0 0.0
    %591 = vmatpush2.msra.mxu0 0.0
    %592 = vmatprep.subr.mxu0 0.0
    %593 = vmatpush2.msra.mxu0 0.0
    %594 = vmatprep.subr.mxu0 0.0
    %595 = vmatpush2.msra.mxu0 0.0
    %596 = vmatprep.subr.mxu0 0.0
    %597 = vmatpush2.msra.mxu0 0.0
    %598 = vmatprep.mubr.f32.mxu0 0.0
    %599 = vmatmul.mubr.f32.gmra.mxu0 %v473
    %v600 = vpop.f32.mrf.mxu0
    %v601 = vadd.f32 0.0, %v600
    %v602 = vpop.f32.mrf.mxu0
    %603 = vmatprep.mubr.f32.mxu0 0.0
    %604 = vmatmul.mubr.f32.gmra.mxu0 %v474
    %v605 = vpop.f32.mrf.mxu0
    %v606 = vadd.f32 0.0, %v605
    %v607 = vpop.f32.mrf.mxu0
    %608 = vmatprep.mubr.f32.mxu0 0.0
    %609 = vmatmul.mubr.f32.gmra.mxu0 %v475
    %v610 = vpop.f32.mrf.mxu0
    %v611 = vadd.f32 0.0, %v610
    %v612 = vpop.f32.mrf.mxu0
    %613 = vmatprep.mubr.f32.mxu0 0.0
    %614 = vmatmul.mubr.f32.gmra.mxu0 %v476
    %v615 = vpop.f32.mrf.mxu0
    %v616 = vadd.f32 0.0, %v615
    %v617 = vpop.f32.mrf.mxu0
    %618 = vdwg.mxu0
    %619 = vmatprep.subr.mxu0 0.0
    %620 = vmatpush1.msra.mxu0 %v516
    %621 = vmatprep.subr.mxu0 0.0
    %622 = vmatpush1.msra.mxu0 %v515
    %623 = vmatprep.subr.mxu0 0.0
    %624 = vmatpush1.msra.mxu0 %v514
    %625 = vmatprep.subr.mxu0 0.0
    %626 = vmatpush1.msra.mxu0 %v513
    %627 = vmatprep.subr.mxu0 0.0
    %628 = vmatpush1.msra.mxu0 %v512
    %629 = vmatprep.subr.mxu0 0.0
    %630 = vmatpush1.msra.mxu0 %v511
    %631 = vmatprep.subr.mxu0 0.0
    %632 = vmatpush1.msra.mxu0 %v510
    %633 = vmatprep.subr.mxu0 0.0
    %634 = vmatpush1.msra.mxu0 %v509
    %635 = vmatprep.subr.mxu0 0.0
    %636 = vmatpush1.msra.mxu0 %v508
    %637 = vmatprep.subr.mxu0 0.0
    %638 = vmatpush1.msra.mxu0 %v507
    %639 = vmatprep.subr.mxu0 0.0
    %640 = vmatpush1.msra.mxu0 %v506
    %641 = vmatprep.subr.mxu0 0.0
    %642 = vmatpush1.msra.mxu0 %v505
    %643 = vmatprep.subr.mxu0 0.0
    %644 = vmatpush1.msra.mxu0 %v504
    %645 = vmatprep.subr.mxu0 0.0
    %646 = vmatpush1.msra.mxu0 %v503
    %647 = vmatprep.subr.mxu0 0.0
    %648 = vmatpush1.msra.mxu0 %v502
    %649 = vmatprep.subr.mxu0 0.0
    %650 = vmatpush1.msra.mxu0 %v501
    %651 = vmatprep.subr.mxu0 0.0
    %652 = vmatpush2.msra.mxu0 0.0
    %653 = vmatprep.subr.mxu0 0.0
    %654 = vmatpush2.msra.mxu0 0.0
    %655 = vmatprep.subr.mxu0 0.0
    %656 = vmatpush2.msra.mxu0 0.0
    %657 = vmatprep.subr.mxu0 0.0
    %658 = vmatpush2.msra.mxu0 0.0
    %659 = vmatprep.subr.mxu0 0.0
    %660 = vmatpush2.msra.mxu0 0.0
    %661 = vmatprep.subr.mxu0 0.0
    %662 = vmatpush2.msra.mxu0 0.0
    %663 = vmatprep.subr.mxu0 0.0
    %664 = vmatpush2.msra.mxu0 0.0
    %665 = vmatprep.subr.mxu0 0.0
    %666 = vmatpush2.msra.mxu0 0.0
    %667 = vmatprep.subr.mxu0 0.0
    %668 = vmatpush2.msra.mxu0 0.0
    %669 = vmatprep.subr.mxu0 0.0
    %670 = vmatpush2.msra.mxu0 0.0
    %671 = vmatprep.subr.mxu0 0.0
    %672 = vmatpush2.msra.mxu0 0.0
    %673 = vmatprep.subr.mxu0 0.0
    %674 = vmatpush2.msra.mxu0 0.0
    %675 = vmatprep.subr.mxu0 0.0
    %676 = vmatpush2.msra.mxu0 0.0
    %677 = vmatprep.subr.mxu0 0.0
    %678 = vmatpush2.msra.mxu0 0.0
    %679 = vmatprep.subr.mxu0 0.0
    %680 = vmatpush2.msra.mxu0 0.0
    %681 = vmatprep.subr.mxu0 0.0
    %682 = vmatpush2.msra.mxu0 0.0
    %683 = vmatprep.mubr.f32.mxu0 0.0
    %684 = vmatmul.mubr.f32.gmra.mxu0 %v485
    %v685 = vpop.f32.mrf.mxu0
    %v686 = vadd.f32 %v601, %v685
    %v687 = vpop.f32.mrf.mxu0
    %688 = vmatprep.mubr.f32.mxu0 0.0
    %689 = vmatmul.mubr.f32.gmra.mxu0 %v486
    %v690 = vpop.f32.mrf.mxu0
    %v691 = vadd.f32 %v606, %v690
    %v692 = vpop.f32.mrf.mxu0
    %693 = vmatprep.mubr.f32.mxu0 0.0
    %694 = vmatmul.mubr.f32.gmra.mxu0 %v487
    %v695 = vpop.f32.mrf.mxu0
    %v696 = vadd.f32 %v611, %v695
    %v697 = vpop.f32.mrf.mxu0
    %698 = vmatprep.mubr.f32.mxu0 0.0
    %699 = vmatmul.mubr.f32.gmra.mxu0 %v488
    %v700 = vpop.f32.mrf.mxu0
    %v701 = vadd.f32 %v616, %v700
    %v702 = vpop.f32.mrf.mxu0
    %703 = vdwg.mxu0
    %s704 = scalar_lea.vmem [#allocation7], 256
    %v705 = vld [vmem:[%s704] sm:$0xff]
    %v706 = vld [vmem:[%s704 + $0x8] sm:$0xff]
    %v707 = vld [vmem:[%s704 + $0x10] sm:$0xff]
    %v708 = vld [vmem:[%s704 + $0x18] sm:$0xff]
    %v709 = vld [vmem:[%s704 + $0x20] sm:$0xff]
    %v710 = vld [vmem:[%s704 + $0x28] sm:$0xff]
    %v711 = vld [vmem:[%s704 + $0x30] sm:$0xff]
    %v712 = vld [vmem:[%s704 + $0x38] sm:$0xff]
    %v713 = vld [vmem:[%s704 + $0x40] sm:$0xff]
    %v714 = vld [vmem:[%s704 + $0x48] sm:$0xff]
    %v715 = vld [vmem:[%s704 + $0x50] sm:$0xff]
    %v716 = vld [vmem:[%s704 + $0x58] sm:$0xff]
    %v717 = vld [vmem:[%s704 + $0x60] sm:$0xff]
    %v718 = vld [vmem:[%s704 + $0x68] sm:$0xff]
    %v719 = vld [vmem:[%s704 + $0x70] sm:$0xff]
    %v720 = vld [vmem:[%s704 + $0x78] sm:$0xff]
    %721 = vmatprep.subr.mxu0 0.0
    %722 = vmatpush1.msra.mxu0 %v720
    %723 = vmatprep.subr.mxu0 0.0
    %724 = vmatpush1.msra.mxu0 %v719
    %725 = vmatprep.subr.mxu0 0.0
    %726 = vmatpush1.msra.mxu0 %v718
    %727 = vmatprep.subr.mxu0 0.0
    %728 = vmatpush1.msra.mxu0 %v717
    %729 = vmatprep.subr.mxu0 0.0
    %730 = vmatpush1.msra.mxu0 %v716
    %731 = vmatprep.subr.mxu0 0.0
    %732 = vmatpush1.msra.mxu0 %v715
    %733 = vmatprep.subr.mxu0 0.0
    %734 = vmatpush1.msra.mxu0 %v714
    %735 = vmatprep.subr.mxu0 0.0
    %736 = vmatpush1.msra.mxu0 %v713
    %737 = vmatprep.subr.mxu0 0.0
    %738 = vmatpush1.msra.mxu0 %v712
    %739 = vmatprep.subr.mxu0 0.0
    %740 = vmatpush1.msra.mxu0 %v711
    %741 = vmatprep.subr.mxu0 0.0
    %742 = vmatpush1.msra.mxu0 %v710
    %743 = vmatprep.subr.mxu0 0.0
    %744 = vmatpush1.msra.mxu0 %v709
    %745 = vmatprep.subr.mxu0 0.0
    %746 = vmatpush1.msra.mxu0 %v708
    %747 = vmatprep.subr.mxu0 0.0
    %748 = vmatpush1.msra.mxu0 %v707
    %749 = vmatprep.subr.mxu0 0.0
    %750 = vmatpush1.msra.mxu0 %v706
    %751 = vmatprep.subr.mxu0 0.0
    %752 = vmatpush1.msra.mxu0 %v705
    %753 = vmatprep.subr.mxu0 0.0
    %754 = vmatpush2.msra.mxu0 0.0
    %755 = vmatprep.subr.mxu0 0.0
    %756 = vmatpush2.msra.mxu0 0.0
    %757 = vmatprep.subr.mxu0 0.0
    %758 = vmatpush2.msra.mxu0 0.0
    %759 = vmatprep.subr.mxu0 0.0
    %760 = vmatpush2.msra.mxu0 0.0
    %761 = vmatprep.subr.mxu0 0.0
    %762 = vmatpush2.msra.mxu0 0.0
    %763 = vmatprep.subr.mxu0 0.0
    %764 = vmatpush2.msra.mxu0 0.0
    %765 = vmatprep.subr.mxu0 0.0
    %766 = vmatpush2.msra.mxu0 0.0
    %767 = vmatprep.subr.mxu0 0.0
    %768 = vmatpush2.msra.mxu0 0.0
    %769 = vmatprep.subr.mxu0 0.0
    %770 = vmatpush2.msra.mxu0 0.0
    %771 = vmatprep.subr.mxu0 0.0
    %772 = vmatpush2.msra.mxu0 0.0
    %773 = vmatprep.subr.mxu0 0.0
    %774 = vmatpush2.msra.mxu0 0.0
    %775 = vmatprep.subr.mxu0 0.0
    %776 = vmatpush2.msra.mxu0 0.0
    %777 = vmatprep.subr.mxu0 0.0
    %778 = vmatpush2.msra.mxu0 0.0
    %779 = vmatprep.subr.mxu0 0.0
    %780 = vmatpush2.msra.mxu0 0.0
    %781 = vmatprep.subr.mxu0 0.0
    %782 = vmatpush2.msra.mxu0 0.0
    %783 = vmatprep.subr.mxu0 0.0
    %784 = vmatpush2.msra.mxu0 0.0
    %785 = vmatprep.mubr.f32.mxu0 0.0
    %786 = vmatmul.mubr.f32.gmra.mxu0 %v497
    %v787 = vpop.f32.mrf.mxu0
    %v788 = vadd.f32 0.0, %v787
    %v789 = vpop.f32.mrf.mxu0
    %790 = vmatprep.mubr.f32.mxu0 0.0
    %791 = vmatmul.mubr.f32.gmra.mxu0 %v498
    %v792 = vpop.f32.mrf.mxu0
    %v793 = vadd.f32 0.0, %v792
    %v794 = vpop.f32.mrf.mxu0
    %795 = vmatprep.mubr.f32.mxu0 0.0
    %796 = vmatmul.mubr.f32.gmra.mxu0 %v499
    %v797 = vpop.f32.mrf.mxu0
    %v798 = vadd.f32 0.0, %v797
    %v799 = vpop.f32.mrf.mxu0
    %800 = vmatprep.mubr.f32.mxu0 0.0
    %801 = vmatmul.mubr.f32.gmra.mxu0 %v500
    %v802 = vpop.f32.mrf.mxu0
    %v803 = vadd.f32 0.0, %v802
    %v804 = vpop.f32.mrf.mxu0
    %805 = vdwg.mxu0
    %v806 = vadd.f32 %v686, %v788
    %v807 = vadd.f32 %v691, %v793
    %v808 = vadd.f32 %v696, %v798
    %v809 = vadd.f32 %v701, %v803
    %v810 = vld [vmem:[%s4] sm:$0x1]
    %v812 = vlaneseq
    %v813 = vshrl.u32 %v812, 7
    %v814 = vsub.s32 0, %v813
    %v815 = vrot.slane %v810, %v814
    %v817 = vadd.f32 %v806, %v815
    %v818 = vadd.f32 %v807, %v815
    %v819 = vadd.f32 %v808, %v815
    %v820 = vadd.f32 %v809, %v815
    %v821 = vadd.f32 %v817, %v62
    %v822 = vadd.f32 %v818, %v63
    %v823 = vadd.f32 %v819, %v64
    %v824 = vadd.f32 %v820, %v65
    %v825 = vmax.f32 %v821, 0.0
    %v826 = vmax.f32 %v822, 0.0
    %v827 = vmax.f32 %v823, 0.0
    %v828 = vmax.f32 %v824, 0.0
    %829 = vst [vmem:[#allocation8] sm:$0xff] %v825
    %830 = vst [vmem:[#allocation8 + $0x8] sm:$0xff] %v826
    %831 = vst [vmem:[#allocation8 + $0x10] sm:$0xff] %v827
    %832 = vst [vmem:[#allocation8 + $0x18] sm:$0xff] %v828
    // Predicated region
    $region34: #{tpu_custom_call.1} parent=1 // pred_check
      _
    $region35: #{tpu_custom_call.1} parent=1 // pred_check_branch
      %834 = sbr.rel (0) target = $region37
    $region36: #{tpu_custom_call.1} parent=1 // pred_region
      %s836 = ssub.s32 512, 512
      %837 = vsyncadd [#allocation4], %s836
      %s838 = sshll.u32 [#allocation8], 4
      %s839 = int_to_ptr.vmem [resolvable:$true] %s838
      %844 = dma.vmem_to_hbm [thread:$0]  %s839, 512, %s5, [#allocation4], 128, 128, 8
    $region37: #{tpu_custom_call.1} parent=1 // pred_fallthru
      _
    // Predicated region
    $region38: #{tpu_custom_call.1} parent=1 // pred_check
      _
    $region39: #{tpu_custom_call.1} parent=1 // pred_check_branch
      %846 = sbr.rel (0) target = $region41
    $region40: #{tpu_custom_call.1} parent=1 // pred_region
      %847 = dma.done [#allocation4], 512
    $region41: #{tpu_custom_call.1} parent=1 // pred_fallthru
      _
    %848 = vsyncpa [#allocation3], 1
    %849 = vsyncpa [#allocation6], 1
    %850 = vsyncpa [#allocation4], 1

</llo_original>
